<compile_context>
chip_gen: v5e
topology: v5e:2x2
jax: 0.10.0
libtpu: 0.0.40
codegen_flags: <defaults>
</compile_context>

<pallas_src>
import functools

import jax
import jax.numpy as jnp
from jax.experimental import pallas as pl
from jax.experimental.pallas import tpu as pltpu

DEFAULT_BF = 96.0
DEFAULT_DIST_LIST = [0.5, 1, 1.5, 2, 5, 10, 20, 30, 50, 100]

_LANES = 128
_MAX_TILE_ROWS = 2048  # (2048, 128) f32 = 1 MiB per ref per grid step.


def _round_up(x: int, m: int) -> int:
    return ((x + m - 1) // m) * m


def _clamp_scale_kernel(preds_ref, target_ref, preds_out_ref, target_out_ref,
                        *, clamp_min, clamp_max, inv_bf):
    # Pure VPU elementwise work: clamp target, scale both by 1/bf.
    t = target_ref[...]
    t = jnp.minimum(jnp.maximum(t, clamp_min), clamp_max)
    target_out_ref[...] = t * inv_bf
    preds_out_ref[...] = preds_ref[...] * inv_bf


class MVSMetric:
    def __init__(self, bf: float = DEFAULT_BF, dist_list=DEFAULT_DIST_LIST):
        self.bf = float(bf)
        # register_buffer equivalents; plain Python min/max (no device round-trip).
        inv_dist = [float(bf) / float(d) for d in dist_list]
        self.clamp_min = min(inv_dist)
        self.clamp_max = max(inv_dist)

    def clamp_and_scale(self, preds: jax.Array, target: jax.Array):
        assert preds.shape == target.shape
        orig_shape = preds.shape
        n = preds.size

        # --- Flatten to a lane-dense (rows, 128) slab, padding as needed. ---
        rows = pl.cdiv(n, _LANES)
        if rows >= _MAX_TILE_ROWS:
            tile_rows = _MAX_TILE_ROWS
        else:
            tile_rows = max(8, _round_up(rows, 8))
        padded_rows = _round_up(rows, tile_rows)
        padded_n = padded_rows * _LANES

        p_flat = preds.reshape(-1).astype(jnp.float32)
        t_flat = target.reshape(-1).astype(jnp.float32)
        if padded_n != n:
            pad = padded_n - n
            p_flat = jnp.pad(p_flat, (0, pad))
            t_flat = jnp.pad(t_flat, (0, pad))
        p2 = p_flat.reshape(padded_rows, _LANES)
        t2 = t_flat.reshape(padded_rows, _LANES)

        kernel = functools.partial(
            _clamp_scale_kernel,
            clamp_min=self.clamp_min,
            clamp_max=self.clamp_max,
            inv_bf=1.0 / self.bf,
        )

        spec = pl.BlockSpec((tile_rows, _LANES), lambda i: (i, 0))
        grid = (padded_rows // tile_rows,)

        cost = pl.CostEstimate(
            flops=3 * padded_n,              # 2 min/max + 1 mul per elem (approx)
            transcendentals=0,
            bytes_accessed=4 * padded_n * 4,  # 2 reads + 2 writes, f32
        )

        p_out, t_out = pl.pallas_call(
            kernel,
            out_shape=(
                jax.ShapeDtypeStruct((padded_rows, _LANES), jnp.float32),
                jax.ShapeDtypeStruct((padded_rows, _LANES), jnp.float32),
            ),
            grid=grid,
            in_specs=[spec, spec],
            out_specs=(spec, spec),
            compiler_params=pltpu.CompilerParams(
                dimension_semantics=("parallel",)),
            cost_estimate=cost,
        )(p2, t2)

        p_res = p_out.reshape(-1)[:n].reshape(orig_shape)
        t_res = t_out.reshape(-1)[:n].reshape(orig_shape)
        return p_res, t_res

    def __call__(self, preds, target, valid_mask=None):
        # TODO(synk): reference forward() is abstract (raises NotImplementedError);
        # subclasses define the actual metric on top of clamp_and_scale.
        raise NotImplementedError()


if __name__ == "__main__":
    key = jax.random.PRNGKey(0)
    k1, k2 = jax.random.split(key)

    # Small NCHW inverse-distance-like maps (non-multiple of 8*128 elements to
    # exercise the padding path).
    B, C, H, W = 2, 1, 32, 60
    preds = jax.random.uniform(k1, (B, C, H, W), jnp.float32,
                               minval=0.1, maxval=250.0)
    target = jax.random.uniform(k2, (B, C, H, W), jnp.float32,
                                minval=0.1, maxval=250.0)

    metric = MVSMetric()
    p_out, t_out = metric.clamp_and_scale(preds, target)
    jax.block_until_ready((p_out, t_out))

    # Pure-JAX reference check.
    t_ref = jnp.clip(target, metric.clamp_min, metric.clamp_max) / metric.bf
    p_ref = preds / metric.bf
    assert p_out.shape == preds.shape and t_out.shape == target.shape
    assert jnp.allclose(p_out, p_ref, rtol=1e-6, atol=1e-6)
    assert jnp.allclose(t_out, t_ref, rtol=1e-6, atol=1e-6)

    print("KERNEL_OK")
</pallas_src>

<mosaic_0001>
module attributes {stable_mosaic.version = 11 : i64} {
  func.func @_clamp_scale_kernel(%arg0: i32, %arg1: memref<32x128xf32, #tpu.memory_space<vmem>>, %arg2: memref<32x128xf32, #tpu.memory_space<vmem>>, %arg3: memref<32x128xf32, #tpu.memory_space<vmem>>, %arg4: memref<32x128xf32, #tpu.memory_space<vmem>>) attributes {dimension_semantics = [#tpu.dimension_semantics<parallel>], iteration_bounds = array<i64: 1>, scalar_prefetch = 0 : i64, scratch_operands = 0 : i64, tpu.core_type = #tpu.core_type<tc>, window_params = [{transform_indices = @transform_0, window_bounds = array<i64: 32, 128>}, {transform_indices = @transform_1, window_bounds = array<i64: 32, 128>}, {transform_indices = @transform_2, window_bounds = array<i64: 32, 128>}, {transform_indices = @transform_3, window_bounds = array<i64: 32, 128>}]} {
    %c0 = arith.constant 0 : index
    %c0_0 = arith.constant 0 : index
    %0 = vector.load %arg2[%c0, %c0_0] : memref<32x128xf32, #tpu.memory_space<vmem>>, vector<32x128xf32>
    %cst = arith.constant 0.959999978 : f32
    %1 = vector.broadcast %cst : f32 to vector<32x128xf32>
    %2 = arith.maximumf %0, %1 : vector<32x128xf32>
    %cst_1 = arith.constant 1.920000e+02 : f32
    %3 = vector.broadcast %cst_1 : f32 to vector<32x128xf32>
    %4 = arith.minimumf %2, %3 : vector<32x128xf32>
    %cst_2 = arith.constant 0.010416667 : f32
    %5 = vector.broadcast %cst_2 : f32 to vector<32x128xf32>
    %6 = arith.mulf %4, %5 : vector<32x128xf32>
    %c0_3 = arith.constant 0 : index
    %c0_4 = arith.constant 0 : index
    %7 = vector.load %arg4[%c0_3, %c0_4] : memref<32x128xf32, #tpu.memory_space<vmem>>, vector<32x128xf32>
    tpu.vector_store %arg4[%c0_3, %c0_4], %6 {strides = array<i32>} : memref<32x128xf32, #tpu.memory_space<vmem>>, vector<32x128xf32>,
    %c0_5 = arith.constant 0 : index
    %c0_6 = arith.constant 0 : index
    %8 = vector.load %arg1[%c0_5, %c0_6] : memref<32x128xf32, #tpu.memory_space<vmem>>, vector<32x128xf32>
    %cst_7 = arith.constant 0.010416667 : f32
    %9 = vector.broadcast %cst_7 : f32 to vector<32x128xf32>
    %10 = arith.mulf %8, %9 : vector<32x128xf32>
    %c0_8 = arith.constant 0 : index
    %c0_9 = arith.constant 0 : index
    %11 = vector.load %arg3[%c0_8, %c0_9] : memref<32x128xf32, #tpu.memory_space<vmem>>, vector<32x128xf32>
    tpu.vector_store %arg3[%c0_8, %c0_9], %10 {strides = array<i32>} : memref<32x128xf32, #tpu.memory_space<vmem>>, vector<32x128xf32>,
    return
  }
  func.func @transform_0(%arg0: i32) -> (i32, i32) {
    %c0_i32 = arith.constant 0 : i32
    %c0_i32_0 = arith.constant 0 : i32
    return %arg0, %c0_i32 : i32, i32
  }
  func.func @transform_1(%arg0: i32) -> (i32, i32) {
    %c0_i32 = arith.constant 0 : i32
    %c0_i32_0 = arith.constant 0 : i32
    return %arg0, %c0_i32 : i32, i32
  }
  func.func @transform_2(%arg0: i32) -> (i32, i32) {
    %c0_i32 = arith.constant 0 : i32
    %c0_i32_0 = arith.constant 0 : i32
    return %arg0, %c0_i32 : i32, i32
  }
  func.func @transform_3(%arg0: i32) -> (i32, i32) {
    %c0_i32 = arith.constant 0 : i32
    %c0_i32_0 = arith.constant 0 : i32
    return %arg0, %c0_i32 : i32, i32
  }
}

</mosaic_0001>

<llo_original>
// kernel: tpu_custom_call.1
$region0: #{tpu_custom_call.1}
  #allocation0 [shape = 'u32[]', space=smem, size = 0x4, offset = 0x4, fixed_abs, tag = 'smem constant byte address 0x4 - core index']
  #allocation1 [shape = 'u32[72,128]{1,0:T(1,128)}', space=vmem, size = 0x9000, scoped, tag = 'internal scratch']
  %s0 = inlined_call_operand.hbm [shape: f32[32,128], index: 0, kind: input, shape index: {}]
  %s1 = inlined_call_operand.hbm [shape: f32[32,128], index: 1, kind: input, shape index: {}]
  %s2 = inlined_call_operand.hbm [shape: f32[32,128], index: 2, kind: output, shape index: {0}]
  %s3 = inlined_call_operand.hbm [shape: f32[32,128], index: 3, kind: output, shape index: {1}]
  %4 = xla_tuple %s2, %s3
  %s5 = sld [smem:[#allocation0]]
  $region34: #{tpu_custom_call.1} parent=0
    _
  %s7 = ssub.s32 1, %s5
  %s8 = scalar_select 0, %s7, %s5
  $region1: #{tpu_custom_call.1} parent=0
    #allocation2 [shape = 'u8[16384]{0}', space=vmem, size = 0x4000, scoped, tag = 'input window, operand 0, single buffered']
    #allocation3 [shape = 's32[1]{0}', space=sflag, size = 0x4, scoped, tag = 'scoped memory for tpu_custom_call.1']
    #allocation4 [shape = 's32[1]{0}', space=sflag, size = 0x4, scoped, tag = 'scoped memory for tpu_custom_call.1']
    #allocation5 [shape = 'u8[16384]{0}', space=vmem, size = 0x4000, scoped, tag = 'input window, operand 1, single buffered']
    #allocation6 [shape = 's32[1]{0}', space=sflag, size = 0x4, scoped, tag = 'scoped memory for tpu_custom_call.1']
    #allocation7 [shape = 'u8[16384]{0}', space=vmem, size = 0x4000, scoped, tag = 'output window, operand 0, single buffered']
    #allocation8 [shape = 'u8[16384]{0}', space=vmem, size = 0x4000, scoped, tag = 'output window, operand 1, single buffered']
    #allocation9 [shape = 's32[1]{0}', space=sflag, size = 0x4, scoped, tag = 'scoped memory for tpu_custom_call.1']
    %9 = vsyncpa [#allocation3], 0
    %10 = vsyncpa [#allocation6], 0
    %11 = vsyncpa [#allocation4], 0
    %12 = vsyncpa [#allocation9], 0
    // Predicated region
    $region2: #{tpu_custom_call.1} parent=1 // pred_check
      _
    $region3: #{tpu_custom_call.1} parent=1 // pred_check_branch
      %14 = sbr.rel (0) target = $region5
    $region4: #{tpu_custom_call.1} parent=1 // pred_region
      %16 = vsyncadd [#allocation3], 0
      %s17 = sshll.u32 %s0, 4
      %s18 = int_to_ptr.hbm [resolvable:$true] %s17
      %s19 = sshll.u32 [#allocation2], 4
      %s20 = int_to_ptr.vmem [resolvable:$true] %s19
      %25 = dma.hbm_to_vmem [thread:$0]  %s18, 512, %s20, [#allocation3], 128, 128, 8
    $region5: #{tpu_custom_call.1} parent=1 // pred_fallthru
      _
    // Predicated region
    $region6: #{tpu_custom_call.1} parent=1 // pred_check
      _
    $region7: #{tpu_custom_call.1} parent=1 // pred_check_branch
      %27 = sbr.rel (0) target = $region9
    $region8: #{tpu_custom_call.1} parent=1 // pred_region
      %29 = vsyncadd [#allocation6], 0
      %s30 = sshll.u32 %s1, 4
      %s31 = int_to_ptr.hbm [resolvable:$true] %s30
      %s32 = sshll.u32 [#allocation5], 4
      %s33 = int_to_ptr.vmem [resolvable:$true] %s32
      %38 = dma.hbm_to_vmem [thread:$0]  %s31, 512, %s33, [#allocation6], 128, 128, 8
    $region9: #{tpu_custom_call.1} parent=1 // pred_fallthru
      _
    // Predicated region
    $region10: #{tpu_custom_call.1} parent=1 // pred_check
      _
    $region11: #{tpu_custom_call.1} parent=1 // pred_check_branch
      %40 = sbr.rel (0) target = $region13
    $region12: #{tpu_custom_call.1} parent=1 // pred_region
      %42 = dma.done [#allocation3], 512
    $region13: #{tpu_custom_call.1} parent=1 // pred_fallthru
      _
    // Predicated region
    $region14: #{tpu_custom_call.1} parent=1 // pred_check
      _
    $region15: #{tpu_custom_call.1} parent=1 // pred_check_branch
      %44 = sbr.rel (0) target = $region17
    $region16: #{tpu_custom_call.1} parent=1 // pred_region
      %46 = dma.done [#allocation6], 512
    $region17: #{tpu_custom_call.1} parent=1 // pred_fallthru
      _
    %v47 = vld [vmem:[#allocation5] sm:$0xff]
    %v48 = vld [vmem:[#allocation5 + $0x8] sm:$0xff]
    %v49 = vld [vmem:[#allocation5 + $0x10] sm:$0xff]
    %v50 = vld [vmem:[#allocation5 + $0x18] sm:$0xff]
    %v51 = vmax.f32 %v47, 0.96
    %v52 = vmax.f32 %v48, 0.96
    %v53 = vmax.f32 %v49, 0.96
    %v54 = vmax.f32 %v50, 0.96
    %v55 = vmin.f32 %v51, 192.0
    %v56 = vmin.f32 %v52, 192.0
    %v57 = vmin.f32 %v53, 192.0
    %v58 = vmin.f32 %v54, 192.0
    %v59 = vmul.f32 %v55, 0.010416667
    %v60 = vmul.f32 %v56, 0.010416667
    %v61 = vmul.f32 %v57, 0.010416667
    %v62 = vmul.f32 %v58, 0.010416667
    %63 = vst [vmem:[#allocation8] sm:$0xff] %v59
    %64 = vst [vmem:[#allocation8 + $0x8] sm:$0xff] %v60
    %65 = vst [vmem:[#allocation8 + $0x10] sm:$0xff] %v61
    %66 = vst [vmem:[#allocation8 + $0x18] sm:$0xff] %v62
    %v67 = vld [vmem:[#allocation2] sm:$0xff]
    %v68 = vld [vmem:[#allocation2 + $0x8] sm:$0xff]
    %v69 = vld [vmem:[#allocation2 + $0x10] sm:$0xff]
    %v70 = vld [vmem:[#allocation2 + $0x18] sm:$0xff]
    %v71 = vmul.f32 %v67, 0.010416667
    %v72 = vmul.f32 %v68, 0.010416667
    %v73 = vmul.f32 %v69, 0.010416667
    %v74 = vmul.f32 %v70, 0.010416667
    %75 = vst [vmem:[#allocation7] sm:$0xff] %v71
    %76 = vst [vmem:[#allocation7 + $0x8] sm:$0xff] %v72
    %77 = vst [vmem:[#allocation7 + $0x10] sm:$0xff] %v73
    %78 = vst [vmem:[#allocation7 + $0x18] sm:$0xff] %v74
    // Predicated region
    $region18: #{tpu_custom_call.1} parent=1 // pred_check
      _
    $region19: #{tpu_custom_call.1} parent=1 // pred_check_branch
      %80 = sbr.rel (0) target = $region21
    $region20: #{tpu_custom_call.1} parent=1 // pred_region
      %82 = vsyncadd [#allocation4], 0
      %s83 = sshll.u32 [#allocation7], 4
      %s84 = int_to_ptr.vmem [resolvable:$true] %s83
      %s85 = sshll.u32 %s2, 4
      %s86 = int_to_ptr.hbm [resolvable:$true] %s85
      %91 = dma.vmem_to_hbm [thread:$0]  %s84, 512, %s86, [#allocation4], 128, 128, 8
    $region21: #{tpu_custom_call.1} parent=1 // pred_fallthru
      _
    // Predicated region
    $region22: #{tpu_custom_call.1} parent=1 // pred_check
      _
    $region23: #{tpu_custom_call.1} parent=1 // pred_check_branch
      %93 = sbr.rel (0) target = $region25
    $region24: #{tpu_custom_call.1} parent=1 // pred_region
      %95 = vsyncadd [#allocation9], 0
      %s96 = sshll.u32 [#allocation8], 4
      %s97 = int_to_ptr.vmem [resolvable:$true] %s96
      %s98 = sshll.u32 %s3, 4
      %s99 = int_to_ptr.hbm [resolvable:$true] %s98
      %104 = dma.vmem_to_hbm [thread:$0]  %s97, 512, %s99, [#allocation9], 128, 128, 8
    $region25: #{tpu_custom_call.1} parent=1 // pred_fallthru
      _
    // Predicated region
    $region26: #{tpu_custom_call.1} parent=1 // pred_check
      _
    $region27: #{tpu_custom_call.1} parent=1 // pred_check_branch
      %106 = sbr.rel (0) target = $region29
    $region28: #{tpu_custom_call.1} parent=1 // pred_region
      %108 = dma.done [#allocation4], 512
    $region29: #{tpu_custom_call.1} parent=1 // pred_fallthru
      _
    // Predicated region
    $region30: #{tpu_custom_call.1} parent=1 // pred_check
      _
    $region31: #{tpu_custom_call.1} parent=1 // pred_check_branch
      %110 = sbr.rel (0) target = $region33
    $region32: #{tpu_custom_call.1} parent=1 // pred_region
      %112 = dma.done [#allocation9], 512
    $region33: #{tpu_custom_call.1} parent=1 // pred_fallthru
      _
    %113 = vsyncpa [#allocation3], 1
    %114 = vsyncpa [#allocation6], 1
    %115 = vsyncpa [#allocation4], 1
    %116 = vsyncpa [#allocation9], 1

</llo_original>
